<compile_context>
chip_gen: v7x
topology: tpu7x:2x2x1
jax: 0.10.0
libtpu: 0.0.40
codegen_flags: <defaults>
</compile_context>

<pallas_src>
import functools

import jax
import jax.numpy as jnp
from jax.experimental import pallas as pl
from jax.experimental.pallas import tpu as pltpu


def _default_loss_kernel(pred_ref, gt_ref, out_ref, acc_ref, *,
                         num_channels, acc_rows):
    # pred_ref / gt_ref: (C, tr, L) VMEM tiles (batch + spatial-chunk squeezed)
    # out_ref:           (8, 128) VMEM per-(batch, chunk) partial-sum tile
    # acc_ref:           (acc_rows, L) f32 VMEM elementwise accumulator
    t = pl.program_id(2)  # innermost, sequential ("arbitrary") spatial axis

    @pl.when(t == 0)
    def _():
        acc_ref[...] = jnp.zeros_like(acc_ref)

    # ---- BCE-with-logits on channel 0 (numerically stable form) ----
    x0 = pred_ref[0].astype(jnp.float32)          # (tr, L)
    y0 = gt_ref[0].astype(jnp.float32)            # (tr, L)
    total = jnp.maximum(x0, 0.0) - x0 * y0 + jnp.log1p(jnp.exp(-jnp.abs(x0)))

    # ---- Cross entropy (probability targets) on channels 1..C-1 ----
    # Per-channel streaming: only (tr, L) temporaries live at any time, never a
    # full (C-1, tr, L) slab.  Exactly (C-1) exps + 1 log per pixel.
    if num_channels > 1:  # static guard: C == 1 would make the slice empty
        m = pred_ref[1].astype(jnp.float32)                      # running max
        for c in range(2, num_channels):
            m = jnp.maximum(m, pred_ref[c].astype(jnp.float32))
        s = jnp.zeros_like(m)       # sum of exp(x_c - m)
        nyx = jnp.zeros_like(m)     # -sum_c y_c * x_c
        ysum = jnp.zeros_like(m)    # sum_c y_c
        for c in range(1, num_channels):
            xc = pred_ref[c].astype(jnp.float32)
            yc = gt_ref[c].astype(jnp.float32)
            s = s + jnp.exp(xc - m)
            nyx = nyx - yc * xc
            ysum = ysum + yc
        lse = jnp.log(s) + m
        total = total + nyx + ysum * lse

    # Cheap per-step VPU folding into a small accumulator; the expensive
    # cross-lane reduce runs exactly once per (batch, chunk) in the epilogue.
    if acc_rows == total.shape[0]:
        acc_ref[...] += total
    else:
        acc_ref[...] += jnp.sum(
            total.reshape(-1, acc_rows, total.shape[1]), axis=0)

    @pl.when(t == pl.num_programs(2) - 1)
    def _():
        sval = jnp.sum(acc_ref[...])
        out_ref[...] = jnp.full(out_ref.shape, sval, dtype=out_ref.dtype)


def _sublane_multiple(dtype):
    return {4: 8, 2: 16, 1: 32}.get(jnp.dtype(dtype).itemsize, 8)


def _choose_tiling(hw, c, itemsize, sub, target_bytes=2 << 20):
    """Pick (lane width L, rows R, rows-per-tile tr) for a (C, R, L) layout."""
    lane = None
    for cand in (2048, 1024, 512, 256, 128):
        if hw % cand == 0:
            lane = cand
            break
    if lane is None:
        # No 128-multiple factor: fall back to full spatial extent on lanes
        # (legal because it equals the full array dim; lane-sparse if hw < 128).
        lane = hw
    rows = hw // lane

    max_rows = max(1, target_bytes // (c * lane * itemsize))
    if rows <= max_rows:
        tr = rows                       # single block covers all rows (tr == R)
    else:
        tr = None
        d = sub
        while d <= max_rows:            # largest divisor of R that is a
            if rows % d == 0:           # multiple of the sublane packing
                tr = d
            d += sub
        if tr is None:
            tr = rows                   # fallback: one block over all rows
    return lane, rows, tr


def default_loss(predictions, ground_truth):
    """DefaultLoss forward. predictions / ground_truth: NCHW, identical shape."""
    N, C, H, W = predictions.shape
    assert ground_truth.shape == predictions.shape
    hw = H * W

    itemsize = max(jnp.dtype(predictions.dtype).itemsize,
                   jnp.dtype(ground_truth.dtype).itemsize)
    sub = max(_sublane_multiple(predictions.dtype),
              _sublane_multiple(ground_truth.dtype))
    lane, rows, tr = _choose_tiling(hw, C, itemsize, sub)

    # Free, copy-less reshape (no transpose): (N, C, H, W) -> (N, C, R, L).
    pred = predictions.reshape(N, C, rows, lane)
    gt = ground_truth.reshape(N, C, rows, lane)

    # Small vreg-height accumulator whenever the tile rows pack into 8s.
    acc_rows = 8 if tr % 8 == 0 else tr

    # Split the spatial tiles into an outer *parallel* chunk so both v7x
    # TensorCores stay busy even for N == 1 / odd N (neutral on v5e/v6e).
    num_tiles = rows // tr
    s_outer = 1
    for cand in (4, 2):
        if num_tiles % cand == 0:
            s_outer = cand
            break
    s_inner = num_tiles // s_outer

    kernel = functools.partial(_default_loss_kernel,
                               num_channels=C, acc_rows=acc_rows)
    grid = (N, s_outer, s_inner)

    # Scoped-VMEM budget from the actual footprint:
    #   2 inputs x 2 pipeline buffers x block + f32 per-channel temporaries
    #   + accumulator + headroom.  Fits v5e's small default scoped limit and
    #   stays under v7x's 64 MiB/TC physical VMEM for sane shapes.
    block_in_bytes = C * tr * lane * itemsize
    slab_f32 = tr * lane * 4
    vmem_limit = 2 * 2 * block_in_bytes + 12 * slab_f32 + (4 << 20)
    vmem_limit = int(min(max(vmem_limit, 32 << 20), 48 << 20))

    # Advisory cost hint: large, memory-bound op with ~(C+2) transcendentals
    # per pixel.
    pixels = N * H * W
    cost = pl.CostEstimate(
        flops=(6 + 7 * max(C - 1, 0)) * pixels,
        transcendentals=(C + 2) * pixels,
        bytes_accessed=2 * N * C * H * W * itemsize + N * s_outer * 8 * 128 * 4,
    )

    partial = pl.pallas_call(
        kernel,
        out_shape=jax.ShapeDtypeStruct((N * s_outer, 8, 128), jnp.float32),
        grid=grid,
        in_specs=[
            pl.BlockSpec((None, C, tr, lane),
                         lambda n, so, si: (n, 0, so * s_inner + si, 0)),
            pl.BlockSpec((None, C, tr, lane),
                         lambda n, so, si: (n, 0, so * s_inner + si, 0)),
        ],
        out_specs=pl.BlockSpec((None, 8, 128),
                               lambda n, so, si: (n * s_outer + so, 0, 0)),
        scratch_shapes=[pltpu.VMEM((acc_rows, lane), jnp.float32)],
        compiler_params=pltpu.CompilerParams(
            dimension_semantics=("parallel", "parallel", "arbitrary"),
            vmem_limit_bytes=vmem_limit),
        cost_estimate=cost,
    )(pred, gt)

    # Tiny final reduction over per-(batch, chunk) partial sums + shared
    # 1/(N*H*W) mean scaling (identical divisor for BCE and CE terms).
    return jnp.sum(partial[:, 0, 0]) * (1.0 / (N * H * W))


def _reference_loss(predictions, ground_truth):
    # pure-JAX reference with identical semantics (for validation)
    x0 = predictions[:, 0, :, :].astype(jnp.float32)
    y0 = ground_truth[:, 0, :, :].astype(jnp.float32)
    bce = jnp.maximum(x0, 0.0) - x0 * y0 + jnp.log1p(jnp.exp(-jnp.abs(x0)))
    Ld = jnp.mean(bce)
    logits = predictions[:, 1:, :, :].astype(jnp.float32)
    targets = ground_truth[:, 1:, :, :].astype(jnp.float32)
    logp = jax.nn.log_softmax(logits, axis=1)
    Lc = jnp.mean(jnp.sum(-targets * logp, axis=1))
    return Ld + Lc


if __name__ == "__main__":
    key = jax.random.PRNGKey(0)
    k1, k2, k3 = jax.random.split(key, 3)

    N, C, H, W = 2, 4, 16, 16
    predictions = jax.random.normal(k1, (N, C, H, W), dtype=jnp.float32)

    # valid targets: channel 0 in [0,1] (BCE), channels 1.. are class probs (CE)
    gt0 = jax.random.uniform(k2, (N, 1, H, W), dtype=jnp.float32)
    gt_rest = jax.nn.softmax(
        jax.random.normal(k3, (N, C - 1, H, W), dtype=jnp.float32), axis=1
    )
    ground_truth = jnp.concatenate([gt0, gt_rest], axis=1)

    loss = default_loss(predictions, ground_truth)
    loss = jax.block_until_ready(loss)

    ref = _reference_loss(predictions, ground_truth)
    assert jnp.allclose(loss, ref, rtol=1e-5, atol=1e-5), (loss, ref)

    print("KERNEL_OK")
</pallas_src>

<mosaic_0001>
module attributes {stable_mosaic.version = 11 : i64} {
  func.func @_default_loss_kernel(%arg0: i32, %arg1: i32, %arg2: i32, %arg3: memref<1x4x1x256xf32, #tpu.memory_space<vmem>>, %arg4: memref<1x4x1x256xf32, #tpu.memory_space<vmem>>, %arg5: memref<1x8x128xf32, #tpu.memory_space<vmem>>, %arg6: memref<1x256xf32, #tpu.memory_space<vmem>>) attributes {dimension_semantics = [#tpu.dimension_semantics<parallel>, #tpu.dimension_semantics<parallel>, #tpu.dimension_semantics<arbitrary>], iteration_bounds = array<i64: 2, 1, 1>, scalar_prefetch = 0 : i64, scratch_operands = 1 : i64, tpu.core_type = #tpu.core_type<tc>, window_params = [{transform_indices = @transform_0, window_bounds = array<i64: 1, 4, 1, 256>}, {transform_indices = @transform_1, window_bounds = array<i64: 1, 4, 1, 256>}, {transform_indices = @transform_2, window_bounds = array<i64: 1, 8, 128>}]} {
    %c0_i32 = arith.constant 0 : i32
    %0 = arith.cmpi eq, %arg2, %c0_i32 : i32
    %1 = arith.extui %0 : i1 to i32
    %c0_i32_0 = arith.constant 0 : i32
    %2 = arith.cmpi ne, %1, %c0_i32_0 : i32
    scf.if %2 {
      %cst_51 = arith.constant 0.000000e+00 : f32
      %69 = vector.broadcast %cst_51 : f32 to vector<1x256xf32>
      %c0_52 = arith.constant 0 : index
      %c0_53 = arith.constant 0 : index
      %70 = vector.load %arg6[%c0_52, %c0_53] : memref<1x256xf32, #tpu.memory_space<vmem>>, vector<1x256xf32>
      tpu.vector_store %arg6[%c0_52, %c0_53], %69 {strides = array<i32>} : memref<1x256xf32, #tpu.memory_space<vmem>>, vector<1x256xf32>,
    } else {
    }
    %c0 = arith.constant 0 : index
    %c0_1 = arith.constant 0 : index
    %c0_2 = arith.constant 0 : index
    %c0_3 = arith.constant 0 : index
    %3 = vector.load %arg3[%c0, %c0_1, %c0_2, %c0_3] : memref<1x4x1x256xf32, #tpu.memory_space<vmem>>, vector<1x1x1x256xf32>
    %4 = vector.shape_cast %3 : vector<1x1x1x256xf32> to vector<1x256xf32>
    %c0_4 = arith.constant 0 : index
    %c0_5 = arith.constant 0 : index
    %c0_6 = arith.constant 0 : index
    %c0_7 = arith.constant 0 : index
    %5 = vector.load %arg4[%c0_4, %c0_5, %c0_6, %c0_7] : memref<1x4x1x256xf32, #tpu.memory_space<vmem>>, vector<1x1x1x256xf32>
    %6 = vector.shape_cast %5 : vector<1x1x1x256xf32> to vector<1x256xf32>
    %cst = arith.constant 0.000000e+00 : f32
    %7 = vector.broadcast %cst : f32 to vector<1x256xf32>
    %8 = arith.maximumf %4, %7 : vector<1x256xf32>
    %9 = arith.mulf %4, %6 : vector<1x256xf32>
    %10 = arith.subf %8, %9 : vector<1x256xf32>
    %11 = math.absf %4 : vector<1x256xf32>
    %cst_8 = arith.constant 0.000000e+00 : f32
    %12 = vector.broadcast %cst_8 : f32 to vector<1x256xf32>
    %13 = arith.subf %12, %11 : vector<1x256xf32>
    %14 = math.exp %13 : vector<1x256xf32>
    %15 = math.log1p %14 : vector<1x256xf32>
    %16 = arith.addf %10, %15 : vector<1x256xf32>
    %c0_9 = arith.constant 0 : index
    %c1 = arith.constant 1 : index
    %c0_10 = arith.constant 0 : index
    %c0_11 = arith.constant 0 : index
    %17 = vector.load %arg3[%c0_9, %c1, %c0_10, %c0_11] : memref<1x4x1x256xf32, #tpu.memory_space<vmem>>, vector<1x1x1x256xf32>
    %18 = vector.shape_cast %17 : vector<1x1x1x256xf32> to vector<1x256xf32>
    %c0_12 = arith.constant 0 : index
    %c2 = arith.constant 2 : index
    %c0_13 = arith.constant 0 : index
    %c0_14 = arith.constant 0 : index
    %19 = vector.load %arg3[%c0_12, %c2, %c0_13, %c0_14] : memref<1x4x1x256xf32, #tpu.memory_space<vmem>>, vector<1x1x1x256xf32>
    %20 = vector.shape_cast %19 : vector<1x1x1x256xf32> to vector<1x256xf32>
    %21 = arith.maximumf %18, %20 : vector<1x256xf32>
    %c0_15 = arith.constant 0 : index
    %c3 = arith.constant 3 : index
    %c0_16 = arith.constant 0 : index
    %c0_17 = arith.constant 0 : index
    %22 = vector.load %arg3[%c0_15, %c3, %c0_16, %c0_17] : memref<1x4x1x256xf32, #tpu.memory_space<vmem>>, vector<1x1x1x256xf32>
    %23 = vector.shape_cast %22 : vector<1x1x1x256xf32> to vector<1x256xf32>
    %24 = arith.maximumf %21, %23 : vector<1x256xf32>
    %cst_18 = arith.constant 0.000000e+00 : f32
    %25 = vector.broadcast %cst_18 : f32 to vector<1x256xf32>
    %cst_19 = arith.constant 0.000000e+00 : f32
    %26 = vector.broadcast %cst_19 : f32 to vector<1x256xf32>
    %cst_20 = arith.constant 0.000000e+00 : f32
    %27 = vector.broadcast %cst_20 : f32 to vector<1x256xf32>
    %c0_21 = arith.constant 0 : index
    %c1_22 = arith.constant 1 : index
    %c0_23 = arith.constant 0 : index
    %c0_24 = arith.constant 0 : index
    %28 = vector.load %arg3[%c0_21, %c1_22, %c0_23, %c0_24] : memref<1x4x1x256xf32, #tpu.memory_space<vmem>>, vector<1x1x1x256xf32>
    %29 = vector.shape_cast %28 : vector<1x1x1x256xf32> to vector<1x256xf32>
    %c0_25 = arith.constant 0 : index
    %c1_26 = arith.constant 1 : index
    %c0_27 = arith.constant 0 : index
    %c0_28 = arith.constant 0 : index
    %30 = vector.load %arg4[%c0_25, %c1_26, %c0_27, %c0_28] : memref<1x4x1x256xf32, #tpu.memory_space<vmem>>, vector<1x1x1x256xf32>
    %31 = vector.shape_cast %30 : vector<1x1x1x256xf32> to vector<1x256xf32>
    %32 = arith.subf %29, %24 : vector<1x256xf32>
    %33 = math.exp %32 : vector<1x256xf32>
    %34 = arith.addf %25, %33 : vector<1x256xf32>
    %35 = arith.mulf %31, %29 : vector<1x256xf32>
    %36 = arith.subf %26, %35 : vector<1x256xf32>
    %37 = arith.addf %27, %31 : vector<1x256xf32>
    %c0_29 = arith.constant 0 : index
    %c2_30 = arith.constant 2 : index
    %c0_31 = arith.constant 0 : index
    %c0_32 = arith.constant 0 : index
    %38 = vector.load %arg3[%c0_29, %c2_30, %c0_31, %c0_32] : memref<1x4x1x256xf32, #tpu.memory_space<vmem>>, vector<1x1x1x256xf32>
    %39 = vector.shape_cast %38 : vector<1x1x1x256xf32> to vector<1x256xf32>
    %c0_33 = arith.constant 0 : index
    %c2_34 = arith.constant 2 : index
    %c0_35 = arith.constant 0 : index
    %c0_36 = arith.constant 0 : index
    %40 = vector.load %arg4[%c0_33, %c2_34, %c0_35, %c0_36] : memref<1x4x1x256xf32, #tpu.memory_space<vmem>>, vector<1x1x1x256xf32>
    %41 = vector.shape_cast %40 : vector<1x1x1x256xf32> to vector<1x256xf32>
    %42 = arith.subf %39, %24 : vector<1x256xf32>
    %43 = math.exp %42 : vector<1x256xf32>
    %44 = arith.addf %34, %43 : vector<1x256xf32>
    %45 = arith.mulf %41, %39 : vector<1x256xf32>
    %46 = arith.subf %36, %45 : vector<1x256xf32>
    %47 = arith.addf %37, %41 : vector<1x256xf32>
    %c0_37 = arith.constant 0 : index
    %c3_38 = arith.constant 3 : index
    %c0_39 = arith.constant 0 : index
    %c0_40 = arith.constant 0 : index
    %48 = vector.load %arg3[%c0_37, %c3_38, %c0_39, %c0_40] : memref<1x4x1x256xf32, #tpu.memory_space<vmem>>, vector<1x1x1x256xf32>
    %49 = vector.shape_cast %48 : vector<1x1x1x256xf32> to vector<1x256xf32>
    %c0_41 = arith.constant 0 : index
    %c3_42 = arith.constant 3 : index
    %c0_43 = arith.constant 0 : index
    %c0_44 = arith.constant 0 : index
    %50 = vector.load %arg4[%c0_41, %c3_42, %c0_43, %c0_44] : memref<1x4x1x256xf32, #tpu.memory_space<vmem>>, vector<1x1x1x256xf32>
    %51 = vector.shape_cast %50 : vector<1x1x1x256xf32> to vector<1x256xf32>
    %52 = arith.subf %49, %24 : vector<1x256xf32>
    %53 = math.exp %52 : vector<1x256xf32>
    %54 = arith.addf %44, %53 : vector<1x256xf32>
    %55 = arith.mulf %51, %49 : vector<1x256xf32>
    %56 = arith.subf %46, %55 : vector<1x256xf32>
    %57 = arith.addf %47, %51 : vector<1x256xf32>
    %58 = math.log %54 : vector<1x256xf32>
    %59 = arith.addf %58, %24 : vector<1x256xf32>
    %60 = arith.addf %16, %56 : vector<1x256xf32>
    %61 = arith.mulf %57, %59 : vector<1x256xf32>
    %62 = arith.addf %60, %61 : vector<1x256xf32>
    %c0_45 = arith.constant 0 : index
    %c0_46 = arith.constant 0 : index
    %63 = vector.load %arg6[%c0_45, %c0_46] : memref<1x256xf32, #tpu.memory_space<vmem>>, vector<1x256xf32>
    %64 = arith.addf %63, %62 : vector<1x256xf32>
    %c0_47 = arith.constant 0 : index
    %c0_48 = arith.constant 0 : index
    %65 = vector.load %arg6[%c0_47, %c0_48] : memref<1x256xf32, #tpu.memory_space<vmem>>, vector<1x256xf32>
    tpu.vector_store %arg6[%c0_47, %c0_48], %64 {strides = array<i32>} : memref<1x256xf32, #tpu.memory_space<vmem>>, vector<1x256xf32>,
    %c0_i32_49 = arith.constant 0 : i32
    %66 = arith.cmpi eq, %arg2, %c0_i32_49 : i32
    %67 = arith.extui %66 : i1 to i32
    %c0_i32_50 = arith.constant 0 : i32
    %68 = arith.cmpi ne, %67, %c0_i32_50 : i32
    scf.if %68 {
      %c0_51 = arith.constant 0 : index
      %c0_52 = arith.constant 0 : index
      %69 = vector.load %arg6[%c0_51, %c0_52] : memref<1x256xf32, #tpu.memory_space<vmem>>, vector<1x256xf32>
      %70 = vector.shape_cast %69 : vector<1x256xf32> to vector<1x1x256xf32>
      %cst_53 = arith.constant dense<0.000000e+00> : vector<1xf32>
      %71 = vector.multi_reduction <add>, %70, %cst_53 [1, 2] : vector<1x1x256xf32> to vector<1xf32>
      %72 = vector.shape_cast %71 : vector<1xf32> to vector<1x1x1xf32>
      %73 = vector.extract %72[0, 0, 0] : f32 from vector<1x1x1xf32>
      %74 = vector.broadcast %73 : f32 to vector<8x128xf32>
      %c0_54 = arith.constant 0 : index
      %c0_55 = arith.constant 0 : index
      %c0_56 = arith.constant 0 : index
      %75 = vector.load %arg5[%c0_54, %c0_55, %c0_56] : memref<1x8x128xf32, #tpu.memory_space<vmem>>, vector<1x8x128xf32>
      %76 = vector.shape_cast %75 : vector<1x8x128xf32> to vector<8x128xf32>
      %77 = vector.shape_cast %74 : vector<8x128xf32> to vector<1x8x128xf32>
      tpu.vector_store %arg5[%c0_54, %c0_55, %c0_56], %77 {strides = array<i32>} : memref<1x8x128xf32, #tpu.memory_space<vmem>>, vector<1x8x128xf32>,
    } else {
    }
    return
  }
  func.func @transform_0(%arg0: i32, %arg1: i32, %arg2: i32) -> (i32, i32, i32, i32) {
    %c1_i32 = arith.constant 1 : i32
    %0 = arith.muli %arg1, %c1_i32 : i32
    %1 = arith.addi %0, %arg2 : i32
    %c0_i32 = arith.constant 0 : i32
    %c0_i32_0 = arith.constant 0 : i32
    %c0_i32_1 = arith.constant 0 : i32
    return %arg0, %c0_i32, %1, %c0_i32_0 : i32, i32, i32, i32
  }
  func.func @transform_1(%arg0: i32, %arg1: i32, %arg2: i32) -> (i32, i32, i32, i32) {
    %c1_i32 = arith.constant 1 : i32
    %0 = arith.muli %arg1, %c1_i32 : i32
    %1 = arith.addi %0, %arg2 : i32
    %c0_i32 = arith.constant 0 : i32
    %c0_i32_0 = arith.constant 0 : i32
    %c0_i32_1 = arith.constant 0 : i32
    return %arg0, %c0_i32, %1, %c0_i32_0 : i32, i32, i32, i32
  }
  func.func @transform_2(%arg0: i32, %arg1: i32, %arg2: i32) -> (i32, i32, i32) {
    %c1_i32 = arith.constant 1 : i32
    %0 = arith.muli %arg0, %c1_i32 : i32
    %1 = arith.addi %0, %arg1 : i32
    %c0_i32 = arith.constant 0 : i32
    %c0_i32_0 = arith.constant 0 : i32
    %c0_i32_1 = arith.constant 0 : i32
    return %1, %c0_i32, %c0_i32_0 : i32, i32, i32
  }
}

</mosaic_0001>

<llo_original>
// kernel: tpu_custom_call.1
$region0: #{tpu_custom_call.1}
  #allocation0 [shape = 'u32[]', space=smem, size = 0x4, offset = 0x4, fixed_abs, tag = 'smem constant byte address 0x4 - core index']
  #allocation1 [shape = 'u32[144,128]{1,0:T(1,128)}', space=vmem, size = 0x12000, scoped, tag = 'internal scratch']
  #allocation2 [shape = 'f32[1,256]{1,0:T(1,128)}', space=vmem, size = 0x400, scoped, tag = 'scratch operand']
  %s0 = inlined_call_operand.hbm [shape: f32[2,4,1,256], index: 0, kind: input, shape index: {}]
  %s1 = inlined_call_operand.hbm [shape: f32[2,4,1,256], index: 1, kind: input, shape index: {}]
  %s2 = inlined_call_operand.hbm [shape: f32[2,8,128], index: 2, kind: output, shape index: {}]
  %s3 = sld [smem:[#allocation0]]
  $region57: #{tpu_custom_call.1} parent=0
    _
  %s5 = ssub.s32 1, %s3
  %s6 = scalar_select 0, %s5, %s3
  $region1: #{tpu_custom_call.1} parent=0
    #allocation3 [shape = 'u8[8192]{0}', space=vmem, size = 0x2000, scoped, tag = 'input window, operand 0']
    #allocation4 [shape = 's32[2]{0}', space=sflag, size = 0x8, scoped, tag = 'scoped memory for tpu_custom_call.1']
    #allocation5 [shape = 's32[2]{0}', space=sflag, size = 0x8, scoped, tag = 'scoped memory for tpu_custom_call.1']
    #allocation6 [shape = 'u8[8192]{0}', space=vmem, size = 0x2000, scoped, tag = 'input window, operand 1']
    #allocation7 [shape = 's32[2]{0}', space=sflag, size = 0x8, scoped, tag = 'scoped memory for tpu_custom_call.1']
    #allocation8 [shape = 'u8[8192]{0}', space=vmem, size = 0x2000, scoped, tag = 'output window, operand 0']
    %7 = vsyncpa [#allocation4], 0
    %s8 = scalar_lea.sflag [#allocation4], 1
    %9 = vsyncpa %s8, 0
    %10 = vsyncpa [#allocation7], 0
    %s11 = scalar_lea.sflag [#allocation7], 1
    %12 = vsyncpa %s11, 0
    %13 = vsyncpa [#allocation5], 0
    %s14 = scalar_lea.sflag [#allocation5], 1
    %15 = vsyncpa %s14, 0
    loop: start=0, step=1, limit=4
    $region2: #{tpu_custom_call.1} parent=1 // loop_pre_header
      _
    $region3: #{tpu_custom_call.1} parent=1 // loop_header
      %s17 = sphi 0, %s21
      %p18 = scmp.ge.s32.totalorder %s17, 4
      %s24 = sphi 0, %s43
      %s25 = sphi 0, %s39
      %s26 = sphi 0, %s35
      %s27 = sphi 0, %s24
      %s28 = sphi 0, %s25
      %s29 = sphi 0, %s26
      %s30 = sphi 0, %s27
      %s31 = sphi 0, %s28
      %s32 = sphi 0, %s29
      %s50 = sphi 0, %s52
      %s53 = sphi 0, %s50
      %s54 = sphi 0, %s53
      %s70 = sphi 0, %s54
      %s80 = sphi 0, %s82
      %s83 = sphi 0, %s80
      %s84 = sphi 0, %s83
      %s100 = sphi 0, %s84
      %s108 = sphi 0, %s110
      %s111 = sphi 0, %s108
      %s112 = sphi 0, %s111
      %s128 = sphi 0, %s112
    $region4: #{tpu_custom_call.1} parent=1 // loop_header_branch
      %20 = sbr.rel (%p18) target = $region8
    $region5: #{tpu_custom_call.1} parent=1 // loop_body
      %s22 = ssub.s32 %s17, 1
      %s23 = ssub.s32 %s17, 2
      %s33 = sadd.s32 1, %s26
      %p34 = scmp.ge.s32.totalorder %s33, 1
      %s35 = scalar_select %p34, 0, %s33
      %s36 = sadd.s32 1, %s25
      %s37 = scalar_select %p34, %s36, %s25
      %p38 = scmp.ge.s32.totalorder %s37, 1
      %s39 = scalar_select %p38, 0, %s37
      %s40 = sadd.s32 1, %s24
      %s41 = scalar_select %p38, %s40, %s24
      %p42 = scmp.ge.s32.totalorder %s41, 2
      %s43 = scalar_select %p42, 0, %s41
      %s44 = sadd.s32 %s25, %s26
      %s45 = sadd.s32 %s39, %s35
      %s46 = ssub.s32 %s24, %s43
      %s47 = ssub.s32 %s44, %s45
      %s48 = sor.u32 %s46, %s47
      %p49 = scmp.eq.s32.totalorder %s48, 0
      %s51 = sadd.s32 %s50, 1
      %s52 = scalar_select %p49, %s50, %s51
      %p55 = pneg %p49
      %p56 = scmp.eq.s32.totalorder %s17, 1
      %p57 = por %p55, %p56
      %p58 = scmp.ne.s32.totalorder %s50, %s53
      %p59 = scmp.eq.s32.totalorder %s17, 0
      %p60 = por %p58, %p59
      %p61 = scmp.ne.s32.totalorder %s50, %s53
      %p62 = scmp.eq.s32.totalorder %s22, 1
      %p63 = por %p61, %p62
      %p64 = scmp.ne.s32.totalorder %s53, %s54
      %p65 = scmp.eq.s32.totalorder %s22, 0
      %p66 = por %p64, %p65
      %p67 = scmp.ne.s32.totalorder %s53, %s54
      %p68 = scmp.eq.s32.totalorder %s23, 1
      %p69 = por %p67, %p68
      %p71 = scmp.ne.s32.totalorder %s54, %s70
      %p72 = scmp.eq.s32.totalorder %s23, 0
      %p73 = por %p71, %p72
      %s74 = sadd.s32 %s25, %s26
      %s75 = sadd.s32 %s39, %s35
      %s76 = ssub.s32 %s24, %s43
      %s77 = ssub.s32 %s74, %s75
      %s78 = sor.u32 %s76, %s77
      %p79 = scmp.eq.s32.totalorder %s78, 0
      %s81 = sadd.s32 %s80, 1
      %s82 = scalar_select %p79, %s80, %s81
      %p85 = pneg %p79
      %p86 = scmp.eq.s32.totalorder %s17, 1
      %p87 = por %p85, %p86
      %p88 = scmp.ne.s32.totalorder %s80, %s83
      %p89 = scmp.eq.s32.totalorder %s17, 0
      %p90 = por %p88, %p89
      %p91 = scmp.ne.s32.totalorder %s80, %s83
      %p92 = scmp.eq.s32.totalorder %s22, 1
      %p93 = por %p91, %p92
      %p94 = scmp.ne.s32.totalorder %s83, %s84
      %p95 = scmp.eq.s32.totalorder %s22, 0
      %p96 = por %p94, %p95
      %p97 = scmp.ne.s32.totalorder %s83, %s84
      %p98 = scmp.eq.s32.totalorder %s23, 1
      %p99 = por %p97, %p98
      %p101 = scmp.ne.s32.totalorder %s84, %s100
      %p102 = scmp.eq.s32.totalorder %s23, 0
      %p103 = por %p101, %p102
      %s104 = sadd.s32 %s24, %s25
      %s105 = sadd.s32 %s43, %s39
      %s106 = ssub.s32 %s104, %s105
      %p107 = scmp.eq.s32.totalorder %s106, 0
      %s109 = sadd.s32 %s108, 1
      %s110 = scalar_select %p107, %s108, %s109
      %p113 = pneg %p107
      %p114 = scmp.eq.s32.totalorder %s17, 1
      %p115 = por %p113, %p114
      %p116 = scmp.ne.s32.totalorder %s108, %s111
      %p117 = scmp.eq.s32.totalorder %s17, 0
      %p118 = por %p116, %p117
      %p119 = scmp.ne.s32.totalorder %s108, %s111
      %p120 = scmp.eq.s32.totalorder %s22, 1
      %p121 = por %p119, %p120
      %p122 = scmp.ne.s32.totalorder %s111, %s112
      %p123 = scmp.eq.s32.totalorder %s22, 0
      %p124 = por %p122, %p123
      %p125 = scmp.ne.s32.totalorder %s111, %s112
      %p126 = scmp.eq.s32.totalorder %s23, 1
      %p127 = por %p125, %p126
      %p129 = scmp.ne.s32.totalorder %s112, %s128
      %p130 = scmp.eq.s32.totalorder %s23, 0
      %p131 = por %p129, %p130
      %p132 = scmp.le.s32.totalorder 1, %s17
      %p133 = scmp.lt.s32.totalorder %s17, 3
      %p134 = pnand %p132, %p133
      %p135 = pneg %p134
      // Predicated region
      $region9: #{tpu_custom_call.1} parent=5 // pred_check
        _
      $region10: #{tpu_custom_call.1} parent=5 // pred_check_branch
        %137 = sbr.rel (%p134) target = $region12
      $region11: #{tpu_custom_call.1} parent=5 // pred_region
        %s138 = ssub.s32 %s17, 1
      $region12: #{tpu_custom_call.1} parent=5 // pred_fallthru
        _
      %p139 = scmp.lt.s32.totalorder %s17, 2
      // Predicated region
      $region13: #{tpu_custom_call.1} parent=5 // pred_check
        %p140 = pneg %p139
      $region14: #{tpu_custom_call.1} parent=5 // pred_check_branch
        %142 = sbr.rel (%p140) target = $region16
      $region15: #{tpu_custom_call.1} parent=5 // pred_region
        // Predicated region
        $region17: #{tpu_custom_call.1} parent=15 // pred_check
          %p143 = pneg %p60
        $region18: #{tpu_custom_call.1} parent=15 // pred_check_branch
          %145 = sbr.rel (%p143) target = $region20
        $region19: #{tpu_custom_call.1} parent=15 // pred_region
          %s146 = sand.u32 %s50, 1
          %s147 = scalar_lea.sflag [#allocation4], %s146
          %s148 = sand.u32 %s50, 1
          %s149 = smul.addr %s148, 8
          %s150 = scalar_lea.vmem [#allocation3], %s149
          %s151 = sadd.s32 %s25, %s26
          %s153 = ssub.s32 128, 128
          %154 = vsyncadd %s147, %s153
          %s155 = smul.addr %s151, 2
          %s156 = smul.addr %s24, 8
          %s157 = sadd.s32 %s155, %s156
          %s158 = smul.addr %s157, 16
          %s159 = scalar_lea.hbm %s0, %s158
          %s160 = sshll.u32 %s150, 4
          %s161 = int_to_ptr.vmem [resolvable:$true] %s160
          %166 = dma.hbm_to_vmem [thread:$0]  %s159, 128, %s161, %s147, 32, 32, 2
        $region20: #{tpu_custom_call.1} parent=15 // pred_fallthru
          _
        // Predicated region
        $region21: #{tpu_custom_call.1} parent=15 // pred_check
          %p167 = pneg %p90
        $region22: #{tpu_custom_call.1} parent=15 // pred_check_branch
          %169 = sbr.rel (%p167) target = $region24
        $region23: #{tpu_custom_call.1} parent=15 // pred_region
          %s170 = sand.u32 %s80, 1
          %s171 = scalar_lea.sflag [#allocation7], %s170
          %s172 = sand.u32 %s80, 1
          %s173 = smul.addr %s172, 8
          %s174 = scalar_lea.vmem [#allocation6], %s173
          %s175 = sadd.s32 %s25, %s26
          %s177 = ssub.s32 128, 128
          %178 = vsyncadd %s171, %s177
          %s179 = smul.addr %s175, 2
          %s180 = smul.addr %s24, 8
          %s181 = sadd.s32 %s179, %s180
          %s182 = smul.addr %s181, 16
          %s183 = scalar_lea.hbm %s1, %s182
          %s184 = sshll.u32 %s174, 4
          %s185 = int_to_ptr.vmem [resolvable:$true] %s184
          %190 = dma.hbm_to_vmem [thread:$0]  %s183, 128, %s185, %s171, 32, 32, 2
        $region24: #{tpu_custom_call.1} parent=15 // pred_fallthru
          _
      $region16: #{tpu_custom_call.1} parent=5 // pred_fallthru
        _
      %p191 = scmp.le.s32.totalorder 1, %s17
      %p192 = scmp.lt.s32.totalorder %s17, 3
      %p193 = pnand %p191, %p192
      %p194 = pneg %p193
      // Predicated region
      $region25: #{tpu_custom_call.1} parent=5 // pred_check
        _
      $region26: #{tpu_custom_call.1} parent=5 // pred_check_branch
        %196 = sbr.rel (%p193) target = $region28
      $region27: #{tpu_custom_call.1} parent=5 // pred_region
        %s197 = ssub.s32 %s17, 1
        %s198 = sand.u32 %s53, 1
        %s199 = scalar_lea.sflag [#allocation4], %s198
        %s200 = sand.u32 %s53, 1
        %s201 = smul.addr %s200, 8
        %s202 = scalar_lea.vmem [#allocation3], %s201
        // Predicated region
        $region29: #{tpu_custom_call.1} parent=27 // pred_check
          %p203 = pneg %p66
        $region30: #{tpu_custom_call.1} parent=27 // pred_check_branch
          %205 = sbr.rel (%p203) target = $region32
        $region31: #{tpu_custom_call.1} parent=27 // pred_region
          %206 = dma.done %s199, 128
        $region32: #{tpu_custom_call.1} parent=27 // pred_fallthru
          _
        %s207 = sand.u32 %s83, 1
        %s208 = scalar_lea.sflag [#allocation7], %s207
        %s209 = sand.u32 %s83, 1
        %s210 = smul.addr %s209, 8
        %s211 = scalar_lea.vmem [#allocation6], %s210
        // Predicated region
        $region33: #{tpu_custom_call.1} parent=27 // pred_check
          %p212 = pneg %p96
        $region34: #{tpu_custom_call.1} parent=27 // pred_check_branch
          %214 = sbr.rel (%p212) target = $region36
        $region35: #{tpu_custom_call.1} parent=27 // pred_region
          %215 = dma.done %s208, 128
        $region36: #{tpu_custom_call.1} parent=27 // pred_fallthru
          _
        %s216 = sand.u32 %s53, 1
        %s217 = scalar_lea.sflag [#allocation4], %s216
        %s218 = sand.u32 %s53, 1
        %s219 = smul.addr %s218, 8
        %s220 = scalar_lea.vmem [#allocation3], %s219
        %p221 = pneg %p66
        %p222 = pneg %p63
        %s223 = sand.u32 %s83, 1
        %s224 = scalar_lea.sflag [#allocation7], %s223
        %s225 = sand.u32 %s83, 1
        %s226 = smul.addr %s225, 8
        %s227 = scalar_lea.vmem [#allocation6], %s226
        %p228 = pneg %p96
        %p229 = pneg %p93
        %p230 = pneg %p124
        %p231 = pneg %p121
        %s232 = sand.u32 %s111, 1
        %s233 = scalar_lea.sflag [#allocation5], %s232
        %s234 = sand.u32 %s111, 1
        %s235 = smul.addr %s234, 8
        %s236 = scalar_lea.vmem [#allocation8], %s235
        %s237 = sadd.s32 %s28, %s29
        %s238 = sadd.s32 %s28, %s29
        %s239 = sadd.s32 %s27, %s28
        %p240 = scmp.eq.s32.totalorder %s29, 0
        // Predicated region
        $region37: #{tpu_custom_call.1} parent=27 // pred_check
          %p241 = pneg %p240
        $region38: #{tpu_custom_call.1} parent=27 // pred_check_branch
          %243 = sbr.rel (%p241) target = $region40
        $region39: #{tpu_custom_call.1} parent=27 // pred_region
          %v244 = vlaneseq
          %vm245 = vcmp.ge.s32.totalorder %v244, 0
          %vm246 = vcmp.lt.s32.totalorder %v244, 256
          %vm247 = vmand %vm245, %vm246
          %248 = vst.msk [vmem:[#allocation2] sm:$0x3] %vm247, 0.0
        $region40: #{tpu_custom_call.1} parent=27 // pred_fallthru
          _
        %v249 = vld [vmem:[%s202] sm:$0x3]
        %v250 = vld [vmem:[%s211] sm:$0x3]
        %v251 = vmax.f32 %v249, 0.0
        %v252 = vmul.f32 %v249, %v250
        %v253 = vsub.f32 %v251, %v252
        %v254 = vand.u32 2147483647, %v249
        %v255 = vsub.f32 0.0, %v254
        %v256 = vmul.f32 %v255, 1.442695
        %v257 = vpow.pop %v256
        %v258 = vadd.f32 %v257, 1.0
        %v259 = vlog2.pop %v258
        %v260 = vmul.f32 %v259, 0.6931472
        %v261 = vmul.f32 -0.5, %v257
        %v262 = vadd.f32 %v261, 1.0
        %v263 = vmul.f32 %v262, %v257
        %v264 = vand.u32 2147483647, %v257
        %vm265 = vcmp.lt.f32.partialorder %v264, 0.0004427343
        %v266 = vsel %vm265, %v263, %v260
        %v267 = vadd.f32 %v253, %v266
        %s268 = scalar_lea.vmem %s202, 2 [#allocation3]
        %v269 = vld [vmem:[%s268] sm:$0x3]
        %s270 = scalar_lea.vmem %s202, 4 [#allocation3]
        %v271 = vld [vmem:[%s270] sm:$0x3]
        %v272 = vmax.f32 %v269, %v271
        %s273 = scalar_lea.vmem %s202, 6 [#allocation3]
        %v274 = vld [vmem:[%s273] sm:$0x3]
        %v275 = vmax.f32 %v272, %v274
        %s276 = scalar_lea.vmem %s211, 2 [#allocation6]
        %v277 = vld [vmem:[%s276] sm:$0x3]
        %v278 = vsub.f32 %v269, %v275
        %v279 = vmul.f32 %v278, 1.442695
        %v280 = vpow.pop %v279
        %v281 = vadd.f32 %v280, 0.0
        %v282 = vmul.f32 %v277, %v269
        %v283 = vsub.f32 0.0, %v282
        %v284 = vadd.f32 %v277, 0.0
        %s285 = scalar_lea.vmem %s211, 4 [#allocation6]
        %v286 = vld [vmem:[%s285] sm:$0x3]
        %v287 = vsub.f32 %v271, %v275
        %v288 = vmul.f32 %v287, 1.442695
        %v289 = vpow.pop %v288
        %v290 = vadd.f32 %v281, %v289
        %v291 = vmul.f32 %v286, %v271
        %v292 = vsub.f32 %v283, %v291
        %v293 = vadd.f32 %v284, %v286
        %s294 = scalar_lea.vmem %s211, 6 [#allocation6]
        %v295 = vld [vmem:[%s294] sm:$0x3]
        %v296 = vsub.f32 %v274, %v275
        %v297 = vmul.f32 %v296, 1.442695
        %v298 = vpow.pop %v297
        %v299 = vadd.f32 %v290, %v298
        %v300 = vmul.f32 %v295, %v274
        %v301 = vsub.f32 %v292, %v300
        %v302 = vadd.f32 %v293, %v295
        %v303 = vlog2.pop %v299
        %v304 = vmul.f32 %v303, 0.6931472
        %v305 = vadd.f32 %v304, %v275
        %v306 = vadd.f32 %v267, %v301
        %v307 = vmul.f32 %v302, %v305
        %v308 = vadd.f32 %v306, %v307
        %v309 = vld [vmem:[#allocation2] sm:$0x3]
        %v310 = vadd.f32 %v309, %v308
        %v311 = vlaneseq
        %vm312 = vcmp.ge.s32.totalorder %v311, 0
        %vm313 = vcmp.lt.s32.totalorder %v311, 256
        %vm314 = vmand %vm312, %vm313
        %315 = vst.msk [vmem:[#allocation2] sm:$0x3] %vm314, %v310
        // Predicated region
        $region41: #{tpu_custom_call.1} parent=27 // pred_check
          %p316 = pneg %p240
        $region42: #{tpu_custom_call.1} parent=27 // pred_check_branch
          %318 = sbr.rel (%p316) target = $region44
        $region43: #{tpu_custom_call.1} parent=27 // pred_region
          %v319 = vld [vmem:[#allocation2] sm:$0x3]
          %v321 = vlaneseq
          %v322 = vshrl.u32 %v321, 7
          %v323 = vsub.s32 0, %v322
          %v324 = vrot.slane %v319, %v323
          %v325 = vlaneseq
          %v326 = vshrl.u32 %v325, 7
          %v327 = vsub.s32 1, %v326
          %v328 = vrot.slane %v319, %v327
          %vm331 = vcmask 1040384
          %v332 = vsel %vm331, %v324, 0.0
          %v333 = vsel %vm331, %v328, 0.0
          %v334 = vadd.f32 %v332, %v333
          %335 = vadd.xlane.f32.xlu0 %v334
          %v336 = vpop.xlane.xlu0 %335
          %v337 = vrot.slane %v336, 4
          %v338 = vadd.f32 %v336, %v337
          %v339 = vrot.slane %v338, 2
          %v340 = vadd.f32 %v338, %v339
          %v341 = vrot.slane %v340, 1
          %v342 = vadd.f32 %v340, %v341
          %s343 = vtos %v342
          %v344 = vstv %s343
          %345 = vst [vmem:[%s236] sm:$0xff] %v344
        $region44: #{tpu_custom_call.1} parent=27 // pred_fallthru
          _
        %s346 = sand.u32 %s111, 1
        %s347 = scalar_lea.sflag [#allocation5], %s346
        %s348 = sand.u32 %s111, 1
        %s349 = smul.addr %s348, 8
        %s350 = scalar_lea.vmem [#allocation8], %s349
        // Predicated region
        $region45: #{tpu_custom_call.1} parent=27 // pred_check
          %p351 = pneg %p121
        $region46: #{tpu_custom_call.1} parent=27 // pred_check_branch
          %353 = sbr.rel (%p351) target = $region48
        $region47: #{tpu_custom_call.1} parent=27 // pred_region
          %s354 = sadd.s32 %s27, %s28
          %s356 = ssub.s32 128, 128
          %357 = vsyncadd %s347, %s356
          %s358 = smul.addr %s354, 128
          %s359 = scalar_lea.hbm %s2, %s358
          %s361 = sshll.u32 %s350, 4
          %s362 = int_to_ptr.vmem [resolvable:$true] %s361
          %364 = dma.vmem_to_hbm [thread:$0]  %s362, 128, %s359, %s347
        $region48: #{tpu_custom_call.1} parent=27 // pred_fallthru
          _
      $region28: #{tpu_custom_call.1} parent=5 // pred_fallthru
        _
      %p365 = scmp.le.s32.totalorder 2, %s17
      // Predicated region
      $region49: #{tpu_custom_call.1} parent=5 // pred_check
        %p366 = pneg %p365
      $region50: #{tpu_custom_call.1} parent=5 // pred_check_branch
        %368 = sbr.rel (%p366) target = $region52
      $region51: #{tpu_custom_call.1} parent=5 // pred_region
        %s369 = ssub.s32 %s17, 2
        // Predicated region
        $region53: #{tpu_custom_call.1} parent=51 // pred_check
          %p370 = pneg %p127
        $region54: #{tpu_custom_call.1} parent=51 // pred_check_branch
          %372 = sbr.rel (%p370) target = $region56
        $region55: #{tpu_custom_call.1} parent=51 // pred_region
          %s373 = sand.u32 %s112, 1
          %s374 = scalar_lea.sflag [#allocation5], %s373
          %s375 = sand.u32 %s112, 1
          %s376 = smul.addr %s375, 8
          %s377 = scalar_lea.vmem [#allocation8], %s376
          %378 = dma.done %s374, 128
        $region56: #{tpu_custom_call.1} parent=51 // pred_fallthru
          _
      $region52: #{tpu_custom_call.1} parent=5 // pred_fallthru
        _
    $region6: #{tpu_custom_call.1} parent=1 // loop_footer
      %s21 = sadd.s32 1, %s17
    $region7: #{tpu_custom_call.1} parent=1 // loop_footer_branch
      %16 = sbr.rel target = $region3
    $region8: #{tpu_custom_call.1} parent=1 // loop_exit
      _
    %379 = vsyncpa [#allocation4], 1
    %s380 = scalar_lea.sflag [#allocation4], 1
    %381 = vsyncpa %s380, 1
    %382 = vsyncpa [#allocation7], 1
    %s383 = scalar_lea.sflag [#allocation7], 1
    %384 = vsyncpa %s383, 1
    %385 = vsyncpa [#allocation5], 1
    %s386 = scalar_lea.sflag [#allocation5], 1
    %387 = vsyncpa %s386, 1

</llo_original>
